<compile_context>
chip_gen: v7x
topology: tpu7x:2x2x1
jax: 0.10.0
libtpu: 0.0.40
codegen_flags: <defaults>
</compile_context>

<pallas_src>
import functools

import jax
import jax.numpy as jnp
from jax.experimental import pallas as pl
from jax.experimental.pallas import tpu as pltpu


def _round_up(a, b):
    return ((a + b - 1) // b) * b


def _cdiv(a, b):
    return (a + b - 1) // b


# -----------------------------------------------------------------------------
# Path A: one-pass kernel -- a full (N, ct, HW) channel slab fits in VMEM.
# -----------------------------------------------------------------------------
def _bn_onepass_kernel(x_ref, w_ref, b_ref, o_ref, *, eps, inv_l):
    """x_ref/o_ref: (N, ct, HW); w_ref/b_ref: (ct, 1); reduce over (N, HW).

    Out-of-range channels of a ragged last block may hold unspecified values;
    the reduction is per-channel, so any NaN/Inf stays in those channels and
    their stores are masked -- they never reach the real output.
    """
    x = x_ref[...].astype(jnp.float32)                                       # (N, ct, HW)

    # Per-channel mean: lane reduce first (XLU), then the small leading-N reduce.
    mean = jnp.sum(jnp.sum(x, axis=-1, keepdims=True), axis=0) * inv_l       # (ct, 1)

    # Centered second pass for the variance; sum of squares -> no clamp needed.
    xc = x - mean[None, :, :]
    var = jnp.sum(jnp.sum(xc * xc, axis=-1, keepdims=True), axis=0) * inv_l  # (ct, 1)

    inv_std = jax.lax.rsqrt(var + eps)
    scale = (w_ref[...].astype(jnp.float32) * inv_std)[None, :, :]           # (1, ct, 1)
    shift = b_ref[...].astype(jnp.float32)[None, :, :]

    o_ref[...] = (xc * scale + shift).astype(o_ref.dtype)


# -----------------------------------------------------------------------------
# Path B: two-pass kernels for large N*H*W (stats over HW chunks, then apply).
# -----------------------------------------------------------------------------
def _bn_stats_kernel(x_ref, w_ref, b_ref, scale_ref, shift_ref,
                     sum_sc, ssq_sc, *, eps, inv_l, hw_total, hw_block):
    """Grid = (c_tiles, hw_tiles); x_ref: (N, ct, hw_block); others: (ct, 1)."""
    hw_i = pl.program_id(1)

    @pl.when(hw_i == 0)
    def _():
        sum_sc[...] = jnp.zeros_like(sum_sc)
        ssq_sc[...] = jnp.zeros_like(ssq_sc)

    x = x_ref[...].astype(jnp.float32)
    if hw_total % hw_block != 0:
        # Mask the ragged final HW chunk so padded lanes don't pollute the sums.
        lane = jax.lax.broadcasted_iota(jnp.int32, x.shape, dimension=2)
        x = jnp.where(hw_i * hw_block + lane < hw_total, x, 0.0)

    sum_sc[...] += jnp.sum(jnp.sum(x, axis=-1, keepdims=True), axis=0)
    ssq_sc[...] += jnp.sum(jnp.sum(x * x, axis=-1, keepdims=True), axis=0)

    @pl.when(hw_i == pl.num_programs(1) - 1)
    def _():
        mean = sum_sc[...] * inv_l
        # TODO(synk): single-pass E[x^2]-mean^2 (clamped) in f32; a Chan-style
        # chunk combine would remove the residual cancellation risk.
        var = jnp.maximum(ssq_sc[...] * inv_l - mean * mean, 0.0)
        scale = w_ref[...].astype(jnp.float32) * jax.lax.rsqrt(var + eps)
        scale_ref[...] = scale
        shift_ref[...] = b_ref[...].astype(jnp.float32) - mean * scale


def _bn_apply_kernel(x_ref, scale_ref, shift_ref, o_ref):
    """Elementwise y = x*scale + shift per (channel tile, HW chunk)."""
    scale = scale_ref[...].astype(jnp.float32)[None, :, :]
    shift = shift_ref[...].astype(jnp.float32)[None, :, :]
    o_ref[...] = (x_ref[...].astype(jnp.float32) * scale + shift).astype(o_ref.dtype)


# -----------------------------------------------------------------------------
# Wrapper
# -----------------------------------------------------------------------------
def _vmem_plan():
    """(block_budget_bytes, vmem_limit_bytes) tuned per chip generation."""
    cap = None
    try:
        cap = pltpu.get_tpu_info().vmem_capacity_bytes
    except Exception:
        cap = None
    if cap and cap >= 100 * 1024 * 1024:          # v5e / v6e: 128 MiB VMEM
        return 36 * 1024 * 1024, 96 * 1024 * 1024
    return 16 * 1024 * 1024, 48 * 1024 * 1024     # v7x: 64 MiB per core


def _pad_affine(weight, bias, c_full, c):
    w = jnp.pad(weight.astype(jnp.float32), (0, c_full - c),
                constant_values=1.0).reshape(c_full, 1)
    b = jnp.pad(bias.astype(jnp.float32), (0, c_full - c)).reshape(c_full, 1)
    return w, b


def meta_batch_norm2d(x_nchw, weight, bias, eps=1e-5,
                      *, _force_two_pass=False, _hw_block=None):
    """Forward of MetaBatchNorm2d (training mode).

    x_nchw: (N, C, H, W); weight/bias: (C,). Returns (N, C, H, W) in x's dtype.
    """
    N, C, H, W = x_nchw.shape
    HW = H * W
    out_dtype = x_nchw.dtype
    xbytes = jnp.dtype(out_dtype).itemsize

    x = x_nchw.reshape(N, C, HW)                   # free, contiguity-preserving
    inv_l = 1.0 / float(N * HW)
    budget_bytes, vmem_limit = _vmem_plan()
    make_params = functools.partial(pltpu.CompilerParams,
                                    vmem_limit_bytes=vmem_limit)

    # Per-channel bytes of one grid step: in+out double buffers (x dtype) plus
    # ~2 block-sized f32 temporaries live inside the kernel.
    per_chan_bytes = N * HW * (4 * xbytes + 2 * 4)
    max_ct = (budget_bytes // max(per_chan_bytes, 1)) // 8 * 8

    if max_ct >= 8 and not _force_two_pass:
        # ------------------ Path A: single pass over HBM --------------------
        c_pad8 = _round_up(C, 8)
        num_tiles = max(1, _cdiv(c_pad8, max_ct))
        if num_tiles == 1 and c_pad8 >= 16:
            num_tiles = 2                 # dual-TC split + DMA/compute overlap
        if num_tiles == 1:
            ct = C                        # block == full channel dim (legal)
        else:
            ct = _round_up(_cdiv(C, num_tiles), 8)
        grid_c = _cdiv(C, ct)

        # Pad only the tiny affine vectors so their blocks are never ragged.
        c_full = grid_c * ct
        w_c1, b_c1 = _pad_affine(weight, bias, c_full, C)

        kernel = functools.partial(_bn_onepass_kernel, eps=float(eps), inv_l=inv_l)
        out = pl.pallas_call(
            kernel,
            out_shape=jax.ShapeDtypeStruct((N, C, HW), out_dtype),
            grid=(grid_c,),
            in_specs=[
                pl.BlockSpec((N, ct, HW), lambda c: (0, c, 0)),
                pl.BlockSpec((ct, 1), lambda c: (c, 0)),
                pl.BlockSpec((ct, 1), lambda c: (c, 0)),
            ],
            out_specs=pl.BlockSpec((N, ct, HW), lambda c: (0, c, 0)),
            compiler_params=make_params(dimension_semantics=("parallel",)),
        )(x, w_c1, b_c1)
        return out.reshape(N, C, H, W)

    # ------------------ Path B: two passes (large N*H*W) --------------------
    ct = 8 if C >= 8 else C
    grid_c = _cdiv(C, ct)
    c_full = grid_c * ct
    w_c1, b_c1 = _pad_affine(weight, bias, c_full, C)

    if _hw_block is not None:
        hw_t = int(_hw_block)
    else:
        per_hw_bytes = N * ct * (4 * xbytes + 4 * 4)
        hw_t = max(128, (budget_bytes // max(per_hw_bytes, 1)) // 128 * 128)
    if hw_t >= HW:
        hw_t = HW
    grid_hw = _cdiv(HW, hw_t)

    stats = functools.partial(_bn_stats_kernel, eps=float(eps), inv_l=inv_l,
                              hw_total=HW, hw_block=hw_t)
    scale, shift = pl.pallas_call(
        stats,
        out_shape=(jax.ShapeDtypeStruct((c_full, 1), jnp.float32),
                   jax.ShapeDtypeStruct((c_full, 1), jnp.float32)),
        grid=(grid_c, grid_hw),
        in_specs=[
            pl.BlockSpec((N, ct, hw_t), lambda c, l: (0, c, l)),
            pl.BlockSpec((ct, 1), lambda c, l: (c, 0)),
            pl.BlockSpec((ct, 1), lambda c, l: (c, 0)),
        ],
        out_specs=(pl.BlockSpec((ct, 1), lambda c, l: (c, 0)),
                   pl.BlockSpec((ct, 1), lambda c, l: (c, 0))),
        scratch_shapes=[pltpu.VMEM((ct, 1), jnp.float32),
                        pltpu.VMEM((ct, 1), jnp.float32)],
        compiler_params=make_params(
            dimension_semantics=("parallel", "arbitrary")),
    )(x, w_c1, b_c1)

    out = pl.pallas_call(
        _bn_apply_kernel,
        out_shape=jax.ShapeDtypeStruct((N, C, HW), out_dtype),
        grid=(grid_c, grid_hw),
        in_specs=[
            pl.BlockSpec((N, ct, hw_t), lambda c, l: (0, c, l)),
            pl.BlockSpec((ct, 1), lambda c, l: (c, 0)),
            pl.BlockSpec((ct, 1), lambda c, l: (c, 0)),
        ],
        out_specs=pl.BlockSpec((N, ct, hw_t), lambda c, l: (0, c, l)),
        compiler_params=make_params(
            dimension_semantics=("parallel", "parallel")),
    )(x, scale, shift)
    return out.reshape(N, C, H, W)


if __name__ == "__main__":
    key = jax.random.PRNGKey(0)
    kx, kw, kb = jax.random.split(key, 3)

    def ref_bn(x, weight, bias, eps):
        c = x.shape[1]
        mean = jnp.mean(x, axis=(0, 2, 3), keepdims=True)
        var = jnp.mean((x - mean) ** 2, axis=(0, 2, 3), keepdims=True)
        return (x - mean) / jnp.sqrt(var + eps) * weight.reshape(1, c, 1, 1) \
            + bias.reshape(1, c, 1, 1)

    N, C, H, W = 2, 4, 16, 16
    eps = 1e-5
    x = jax.random.normal(kx, (N, C, H, W), dtype=jnp.float32)
    # nn.BatchNorm2d default init is weight=1, bias=0; use random values so the
    # affine path is actually exercised.
    weight = jax.random.uniform(kw, (C,), dtype=jnp.float32, minval=0.5, maxval=1.5)
    bias = jax.random.normal(kb, (C,), dtype=jnp.float32) * 0.1

    out = jax.block_until_ready(meta_batch_norm2d(x, weight, bias, eps=eps))
    assert out.shape == (N, C, H, W)
    assert jnp.allclose(out, ref_bn(x, weight, bias, eps), atol=1e-4, rtol=1e-4)

    # Also exercise the large-N*H*W fallback (two-pass) path at a small shape.
    N2, C2 = 2, 8
    x2 = jax.random.normal(kx, (N2, C2, H, W), dtype=jnp.float32)
    w2 = jax.random.uniform(kw, (C2,), dtype=jnp.float32, minval=0.5, maxval=1.5)
    b2 = jax.random.normal(kb, (C2,), dtype=jnp.float32) * 0.1
    out2 = jax.block_until_ready(
        meta_batch_norm2d(x2, w2, b2, eps=eps, _force_two_pass=True, _hw_block=128))
    assert jnp.allclose(out2, ref_bn(x2, w2, b2, eps), atol=1e-4, rtol=1e-4)

    # TODO(synk): running_mean/running_var/num_batches_tracked momentum updates
    # are training-time buffer side effects that do not affect the returned
    # forward value; not emitted here.
    print("KERNEL_OK")
</pallas_src>

<mosaic_0001>
module attributes {stable_mosaic.version = 11 : i64} {
  func.func @_bn_onepass_kernel(%arg0: i32, %arg1: memref<2x4x256xf32, #tpu.memory_space<vmem>>, %arg2: memref<4x1xf32, #tpu.memory_space<vmem>>, %arg3: memref<4x1xf32, #tpu.memory_space<vmem>>, %arg4: memref<2x4x256xf32, #tpu.memory_space<vmem>>) attributes {dimension_semantics = [#tpu.dimension_semantics<parallel>], iteration_bounds = array<i64: 1>, scalar_prefetch = 0 : i64, scratch_operands = 0 : i64, tpu.core_type = #tpu.core_type<tc>, window_params = [{transform_indices = @transform_0, window_bounds = array<i64: 2, 4, 256>}, {transform_indices = @transform_1, window_bounds = array<i64: 4, 1>}, {transform_indices = @transform_2, window_bounds = array<i64: 4, 1>}, {transform_indices = @transform_3, window_bounds = array<i64: 2, 4, 256>}]} {
    %c0 = arith.constant 0 : index
    %c0_0 = arith.constant 0 : index
    %c0_1 = arith.constant 0 : index
    %0 = vector.load %arg1[%c0, %c0_0, %c0_1] : memref<2x4x256xf32, #tpu.memory_space<vmem>>, vector<2x4x256xf32>
    %cst = arith.constant dense<0.000000e+00> : vector<2x4xf32>
    %1 = vector.multi_reduction <add>, %0, %cst [2] : vector<2x4x256xf32> to vector<2x4xf32>
    %2 = vector.shape_cast %1 : vector<2x4xf32> to vector<2x4x1xf32>
    %cst_2 = arith.constant dense<0.000000e+00> : vector<4x1xf32>
    %3 = vector.multi_reduction <add>, %2, %cst_2 [0] : vector<2x4x1xf32> to vector<4x1xf32>
    %cst_3 = arith.constant 0.001953125 : f32
    %4 = vector.broadcast %cst_3 : f32 to vector<4x1xf32>
    %5 = arith.mulf %3, %4 : vector<4x1xf32>
    %6 = vector.shape_cast %5 : vector<4x1xf32> to vector<1x4x1xf32>
    %7 = vector.broadcast %6 : vector<1x4x1xf32> to vector<2x4x256xf32>
    %8 = arith.subf %0, %7 : vector<2x4x256xf32>
    %9 = arith.mulf %8, %8 : vector<2x4x256xf32>
    %cst_4 = arith.constant dense<0.000000e+00> : vector<2x4xf32>
    %10 = vector.multi_reduction <add>, %9, %cst_4 [2] : vector<2x4x256xf32> to vector<2x4xf32>
    %11 = vector.shape_cast %10 : vector<2x4xf32> to vector<2x4x1xf32>
    %cst_5 = arith.constant dense<0.000000e+00> : vector<4x1xf32>
    %12 = vector.multi_reduction <add>, %11, %cst_5 [0] : vector<2x4x1xf32> to vector<4x1xf32>
    %cst_6 = arith.constant 0.001953125 : f32
    %13 = vector.broadcast %cst_6 : f32 to vector<4x1xf32>
    %14 = arith.mulf %12, %13 : vector<4x1xf32>
    %cst_7 = arith.constant 9.99999974E-6 : f32
    %15 = vector.broadcast %cst_7 : f32 to vector<4x1xf32>
    %16 = arith.addf %14, %15 : vector<4x1xf32>
    %17 = math.rsqrt %16 : vector<4x1xf32>
    %c0_8 = arith.constant 0 : index
    %c0_9 = arith.constant 0 : index
    %18 = vector.load %arg2[%c0_8, %c0_9] : memref<4x1xf32, #tpu.memory_space<vmem>>, vector<4x1xf32>
    %19 = arith.mulf %18, %17 : vector<4x1xf32>
    %20 = vector.shape_cast %19 : vector<4x1xf32> to vector<1x4x1xf32>
    %c0_10 = arith.constant 0 : index
    %c0_11 = arith.constant 0 : index
    %21 = vector.load %arg3[%c0_10, %c0_11] : memref<4x1xf32, #tpu.memory_space<vmem>>, vector<4x1xf32>
    %22 = vector.shape_cast %21 : vector<4x1xf32> to vector<1x4x1xf32>
    %23 = vector.broadcast %20 : vector<1x4x1xf32> to vector<2x4x256xf32>
    %24 = arith.mulf %8, %23 : vector<2x4x256xf32>
    %25 = vector.broadcast %22 : vector<1x4x1xf32> to vector<2x4x256xf32>
    %26 = arith.addf %24, %25 : vector<2x4x256xf32>
    %c0_12 = arith.constant 0 : index
    %c0_13 = arith.constant 0 : index
    %c0_14 = arith.constant 0 : index
    %27 = vector.load %arg4[%c0_12, %c0_13, %c0_14] : memref<2x4x256xf32, #tpu.memory_space<vmem>>, vector<2x4x256xf32>
    tpu.vector_store %arg4[%c0_12, %c0_13, %c0_14], %26 {strides = array<i32>} : memref<2x4x256xf32, #tpu.memory_space<vmem>>, vector<2x4x256xf32>,
    return
  }
  func.func @transform_0(%arg0: i32) -> (i32, i32, i32) {
    %c0_i32 = arith.constant 0 : i32
    %c0_i32_0 = arith.constant 0 : i32
    %c0_i32_1 = arith.constant 0 : i32
    return %c0_i32, %arg0, %c0_i32_0 : i32, i32, i32
  }
  func.func @transform_1(%arg0: i32) -> (i32, i32) {
    %c0_i32 = arith.constant 0 : i32
    %c0_i32_0 = arith.constant 0 : i32
    return %arg0, %c0_i32 : i32, i32
  }
  func.func @transform_2(%arg0: i32) -> (i32, i32) {
    %c0_i32 = arith.constant 0 : i32
    %c0_i32_0 = arith.constant 0 : i32
    return %arg0, %c0_i32 : i32, i32
  }
  func.func @transform_3(%arg0: i32) -> (i32, i32, i32) {
    %c0_i32 = arith.constant 0 : i32
    %c0_i32_0 = arith.constant 0 : i32
    %c0_i32_1 = arith.constant 0 : i32
    return %c0_i32, %arg0, %c0_i32_0 : i32, i32, i32
  }
}

</mosaic_0001>

<llo_original>
// kernel: tpu_custom_call.1
$region0: #{tpu_custom_call.1}
  #allocation0 [shape = 'u32[]', space=smem, size = 0x4, offset = 0x4, fixed_abs, tag = 'smem constant byte address 0x4 - core index']
  #allocation1 [shape = 'u32[144,128]{1,0:T(1,128)}', space=vmem, size = 0x12000, scoped, tag = 'internal scratch']
  %s0 = inlined_call_operand.hbm [shape: f32[2,4,256], index: 0, kind: input, shape index: {}]
  %s1 = inlined_call_operand.vmem [shape: f32[4,1], index: 1, kind: input, shape index: {}]
  %s2 = inlined_call_operand.vmem [shape: f32[4,1], index: 2, kind: input, shape index: {}]
  %s3 = inlined_call_operand.hbm [shape: f32[2,4,256], index: 3, kind: output, shape index: {}]
  %s4 = sld [smem:[#allocation0]]
  $region26: #{tpu_custom_call.1} parent=0
    _
  %s6 = ssub.s32 1, %s4
  %s7 = scalar_select 0, %s6, %s4
  $region1: #{tpu_custom_call.1} parent=0
    #allocation2 [shape = 'u8[8192]{0}', space=vmem, size = 0x2000, scoped, tag = 'input window, operand 0, single buffered']
    #allocation3 [shape = 's32[1]{0}', space=sflag, size = 0x4, scoped, tag = 'scoped memory for tpu_custom_call.1']
    #allocation4 [shape = 's32[1]{0}', space=sflag, size = 0x4, scoped, tag = 'scoped memory for tpu_custom_call.1']
    #allocation5 [shape = 'u8[8192]{0}', space=vmem, size = 0x2000, scoped, tag = 'output window, operand 0, single buffered']
    %8 = vsyncpa [#allocation3], 0
    %9 = vsyncpa [#allocation4], 0
    // Predicated region
    $region2: #{tpu_custom_call.1} parent=1 // pred_check
      _
    $region3: #{tpu_custom_call.1} parent=1 // pred_check_branch
      %11 = sbr.rel (0) target = $region5
    $region4: #{tpu_custom_call.1} parent=1 // pred_region
      %s13 = ssub.s32 256, 256
      %14 = vsyncadd [#allocation3], %s13
      %s15 = sshll.u32 [#allocation2], 4
      %s16 = int_to_ptr.vmem [resolvable:$true] %s15
      %21 = dma.hbm_to_vmem [thread:$0]  %s0, 256, %s16, [#allocation3], 128, 128, 8
    $region5: #{tpu_custom_call.1} parent=1 // pred_fallthru
      _
    // Predicated region
    $region6: #{tpu_custom_call.1} parent=1 // pred_check
      _
    $region7: #{tpu_custom_call.1} parent=1 // pred_check_branch
      %23 = sbr.rel (0) target = $region9
    $region8: #{tpu_custom_call.1} parent=1 // pred_region
      _
    $region9: #{tpu_custom_call.1} parent=1 // pred_fallthru
      _
    // Predicated region
    $region10: #{tpu_custom_call.1} parent=1 // pred_check
      _
    $region11: #{tpu_custom_call.1} parent=1 // pred_check_branch
      %25 = sbr.rel (0) target = $region13
    $region12: #{tpu_custom_call.1} parent=1 // pred_region
      _
    $region13: #{tpu_custom_call.1} parent=1 // pred_fallthru
      _
    // Predicated region
    $region14: #{tpu_custom_call.1} parent=1 // pred_check
      _
    $region15: #{tpu_custom_call.1} parent=1 // pred_check_branch
      %27 = sbr.rel (0) target = $region17
    $region16: #{tpu_custom_call.1} parent=1 // pred_region
      %28 = dma.done [#allocation3], 256
    $region17: #{tpu_custom_call.1} parent=1 // pred_fallthru
      _
    %v29 = vld [vmem:[#allocation2] sm:$0xff]
    %v30 = vld [vmem:[#allocation2 + $0x8] sm:$0xff]
    %v33 = vcombine.high %v29, %v29
    %v34 = vcombine.high %v30, %v30
    %vm37 = vcmask 1043456
    %v38 = vsel %vm37, %v29, 0.0
    %v39 = vsel %vm37, %v33, 0.0
    %v40 = vadd.f32 %v38, %v39
    %41 = vadd.xlane.f32.xlu0 %v40
    %v42 = vpop.xlane.xlu0 %41
    %v43 = vsel %vm37, %v30, 0.0
    %v44 = vsel %vm37, %v34, 0.0
    %v45 = vadd.f32 %v43, %v44
    %46 = vadd.xlane.f32.xlu0 %v45
    %v47 = vpop.xlane.xlu0 %46
    %v48 = vsel %vm37, %v42, 0.0
    %v49 = vsel %vm37, %v47, 0.0
    %v50 = vadd.f32 %v48, %v49
    %v51 = vmul.f32 %v50, 0.001953125
    %v54 = vunpack.c.l.s4 839922192
    %v55 = vunpack.c.0.s8 %v54
    %v56 = vlaneseq
    %v57 = vshrl.u32 %v56, 7
    %v58 = vsub.s32 %v55, %v57
    %v59 = vrot.slane %v51, %v58
    %v61 = vsub.f32 %v29, %v59
    %v62 = vsub.f32 %v30, %v59
    %v63 = vmul.f32 %v61, %v61
    %v64 = vmul.f32 %v62, %v62
    %v67 = vcombine.high %v63, %v63
    %v68 = vcombine.high %v64, %v64
    %v71 = vsel %vm37, %v63, 0.0
    %v72 = vsel %vm37, %v67, 0.0
    %v73 = vadd.f32 %v71, %v72
    %74 = vadd.xlane.f32.xlu0 %v73
    %v75 = vpop.xlane.xlu0 %74
    %v76 = vsel %vm37, %v64, 0.0
    %v77 = vsel %vm37, %v68, 0.0
    %v78 = vadd.f32 %v76, %v77
    %79 = vadd.xlane.f32.xlu0 %v78
    %v80 = vpop.xlane.xlu0 %79
    %v81 = vsel %vm37, %v75, 0.0
    %v82 = vsel %vm37, %v80, 0.0
    %v83 = vadd.f32 %v81, %v82
    %v84 = vmul.f32 %v83, 0.001953125
    %v85 = vadd.f32 %v84, 1e-05
    %v86 = vrsqrt.pop %v85
    %v87 = vld [vmem:[%s1] sm:$0xf]
    %v88 = vmul.f32 %v87, %v86
    %v89 = vld [vmem:[%s2] sm:$0xf]
    %91 = vset.pattern.permute.xlu0 0
    %92 = vperm.xlu0 %91, %v88
    %v93 = vpop.permute.xlu0 %92
    %v95 = vunpack.c.l.s4 839922192
    %v96 = vunpack.c.0.s8 %v95
    %v97 = vlaneseq
    %v98 = vshrl.u32 %v97, 7
    %v99 = vsub.s32 %v96, %v98
    %v100 = vrot.slane %v93, %v99
    %v102 = vmul.f32 %v61, %v100
    %v103 = vmul.f32 %v62, %v100
    %105 = vset.pattern.permute.xlu0 0
    %106 = vperm.xlu0 %105, %v89
    %v107 = vpop.permute.xlu0 %106
    %v109 = vunpack.c.l.s4 839922192
    %v110 = vunpack.c.0.s8 %v109
    %v111 = vlaneseq
    %v112 = vshrl.u32 %v111, 7
    %v113 = vsub.s32 %v110, %v112
    %v114 = vrot.slane %v107, %v113
    %v116 = vadd.f32 %v102, %v114
    %v117 = vadd.f32 %v103, %v114
    %118 = vst [vmem:[#allocation5] sm:$0xff] %v116
    %119 = vst [vmem:[#allocation5 + $0x8] sm:$0xff] %v117
    // Predicated region
    $region18: #{tpu_custom_call.1} parent=1 // pred_check
      _
    $region19: #{tpu_custom_call.1} parent=1 // pred_check_branch
      %121 = sbr.rel (0) target = $region21
    $region20: #{tpu_custom_call.1} parent=1 // pred_region
      %s123 = ssub.s32 256, 256
      %124 = vsyncadd [#allocation4], %s123
      %s125 = sshll.u32 [#allocation5], 4
      %s126 = int_to_ptr.vmem [resolvable:$true] %s125
      %131 = dma.vmem_to_hbm [thread:$0]  %s126, 256, %s3, [#allocation4], 128, 128, 8
    $region21: #{tpu_custom_call.1} parent=1 // pred_fallthru
      _
    // Predicated region
    $region22: #{tpu_custom_call.1} parent=1 // pred_check
      _
    $region23: #{tpu_custom_call.1} parent=1 // pred_check_branch
      %133 = sbr.rel (0) target = $region25
    $region24: #{tpu_custom_call.1} parent=1 // pred_region
      %134 = dma.done [#allocation4], 256
    $region25: #{tpu_custom_call.1} parent=1 // pred_fallthru
      _
    %135 = vsyncpa [#allocation3], 1
    %136 = vsyncpa [#allocation4], 1

</llo_original>
